<compile_context>
chip_gen: v5e
topology: v5e:2x2
jax: 0.10.0
libtpu: 0.0.40
codegen_flags: <defaults>
</compile_context>

<pallas_src>
import functools
import math

import jax
import jax.numpy as jnp
from jax.experimental import pallas as pl
from jax.experimental.pallas import tpu as pltpu


def make_pe_table(d_model: int, max_len: int = 5000) -> jnp.ndarray:
    """Deterministic positional-encoding buffer, shape (max_len, 1, d_model)."""
    position = jnp.arange(0, max_len, dtype=jnp.float32)[:, None]            # (L, 1)
    div_term = jnp.exp(
        jnp.arange(0, d_model, 2, dtype=jnp.float32) * (-math.log(10000.0) / d_model)
    )                                                                        # (D/2,)
    ang = position * div_term                                                # (L, D/2)
    pe = jnp.zeros((max_len, d_model), dtype=jnp.float32)
    pe = pe.at[:, 0::2].set(jnp.sin(ang))
    pe = pe.at[:, 1::2].set(jnp.cos(ang))
    return pe[:, None, :]                                                    # (L, 1, D)


# ----------------------------- kernels ------------------------------------ #

def _pe_add_kernel(x_ref, pe_ref, o_ref):
    # x_ref: (tile_s, B*D)   pe_ref: (tile_s, D)
    reps = x_ref.shape[1] // pe_ref.shape[1]
    o_ref[...] = x_ref[...] + jnp.tile(pe_ref[...], (1, reps))


def _pe_add_dropout_kernel(x_ref, pe_ref, bits_ref, o_ref, *, threshold, scale):
    # x_ref: (tile_s, B*D)   pe_ref: (tile_s, D)   bits_ref: (tile_s, B*D) uint32
    reps = x_ref.shape[1] // pe_ref.shape[1]
    y = x_ref[...] + jnp.tile(pe_ref[...], (1, reps))          # in x.dtype
    keep = bits_ref[...] >= jnp.uint32(threshold)               # P(keep) ~= 1-p
    # Inverted dropout as a single mask-multiply: y * (keep ? 1/(1-p) : 0)
    mask = jnp.where(keep,
                     jnp.asarray(scale, dtype=y.dtype),
                     jnp.asarray(0, dtype=y.dtype))
    o_ref[...] = y * mask


# ---------------------------- tiling helper -------------------------------- #

def _choose_tile_s(S: int, row_bytes: int,
                   target_block_bytes: int = 2 << 20,   # ~2 MiB per x block
                   min_steps: int = 4) -> int:
    """Largest multiple-of-8 divisor of S whose block fits ~2 MiB, preferring
    >= min_steps grid steps so the DMA pipeline actually overlaps."""
    if S % 8 != 0:
        # Block second-to-last dim must be a multiple of 8 or the full extent.
        return S
    cands = [t for t in range(8, S + 1, 8) if S % t == 0]
    good = [t for t in cands
            if t * row_bytes <= target_block_bytes and S // t >= min_steps]
    if good:
        return max(good)
    fit = [t for t in cands if t * row_bytes <= target_block_bytes]
    if fit:
        return max(fit)
    return 8


# ------------------------------ wrapper ------------------------------------ #

def positional_encoding(x, pe_table, *, p: float = 0.1, training: bool = True,
                        rng_key=None, tile_s: int | None = None,
                        donate_x: bool = False):
    """x: (S, B, D).  Returns (S, B, D), same dtype as x."""
    S, B, D = x.shape
    BD = B * D
    itemsize = jnp.dtype(x.dtype).itemsize

    # Lane/sublane-dense 2D views (reshapes are bitcasts, no data movement).
    x2 = x.reshape(S, BD)
    pe2 = pe_table[:S, 0, :].astype(x.dtype)                     # (S, D)

    p_eff = float(p) if training else 0.0

    if tile_s is None:
        tile_s = _choose_tile_s(S, BD * itemsize)
    assert S % tile_s == 0 and (tile_s % 8 == 0 or tile_s == S)
    grid = (S // tile_s,)

    x_spec = pl.BlockSpec((tile_s, BD), lambda i: (i, 0))
    pe_spec = pl.BlockSpec((tile_s, D), lambda i: (i, 0))
    out_spec = pl.BlockSpec((tile_s, BD), lambda i: (i, 0))

    compiler_params = pltpu.CompilerParams(
        dimension_semantics=("parallel",),      # grid steps are independent
        vmem_limit_bytes=64 * 1024 * 1024,      # safe on v7x, > default on v5e/v6e
    )

    bytes_x = S * BD * itemsize
    bytes_pe = S * D * itemsize

    if p_eff > 0.0:
        if rng_key is None:
            rng_key = jax.random.PRNGKey(0)
        # Tiling-invariant dropout bits, generated once for the whole array.
        bits = jax.random.bits(rng_key, (S, BD), dtype=jnp.uint32)
        threshold = min(int(p_eff * (2.0 ** 32)), 2 ** 32 - 1)
        scale = 1.0 / (1.0 - p_eff)
        kernel = functools.partial(_pe_add_dropout_kernel,
                                   threshold=threshold, scale=scale)
        in_specs = [x_spec, pe_spec,
                    pl.BlockSpec((tile_s, BD), lambda i: (i, 0))]
        args = (x2, pe2, bits)
        cost = pl.CostEstimate(flops=3 * S * BD, transcendentals=0,
                               bytes_accessed=2 * bytes_x + bytes_pe + S * BD * 4)
    else:
        kernel = _pe_add_kernel
        in_specs = [x_spec, pe_spec]
        args = (x2, pe2)
        cost = pl.CostEstimate(flops=S * BD, transcendentals=0,
                               bytes_accessed=2 * bytes_x + bytes_pe)

    out2 = pl.pallas_call(
        kernel,
        out_shape=jax.ShapeDtypeStruct((S, BD), x.dtype),
        grid=grid,
        in_specs=in_specs,
        out_specs=out_spec,
        compiler_params=compiler_params,
        cost_estimate=cost,
        input_output_aliases=({0: 0} if donate_x else {}),
    )(*args)
    return out2.reshape(S, B, D)


# ------------------------------- demo/test ---------------------------------- #

if __name__ == "__main__":
    D = 32
    P = 0.1
    pe_table = make_pe_table(D, max_len=5000)

    def run_checks(S, B, key):
        kx, kd = jax.random.split(key)
        x = jax.random.normal(kx, (S, B, D), dtype=jnp.float32)
        pe_slice = pe_table[:S]                                   # (S, 1, D)

        # Eval mode: exact match against pure-JAX reference.
        out_eval = jax.block_until_ready(
            positional_encoding(x, pe_table, p=P, training=False))
        ref_eval = x + pe_slice
        assert out_eval.shape == (S, B, D) and out_eval.dtype == jnp.float32
        assert jnp.allclose(out_eval, ref_eval, atol=1e-6, rtol=1e-6)

        # Train mode: exact match against a reference using the same bits.
        out_train = jax.block_until_ready(
            positional_encoding(x, pe_table, p=P, training=True, rng_key=kd))
        bits = jax.random.bits(kd, (S, B * D), dtype=jnp.uint32).reshape(S, B, D)
        threshold = min(int(P * (2.0 ** 32)), 2 ** 32 - 1)
        keep = bits >= jnp.uint32(threshold)
        ref_train = ref_eval * jnp.where(keep, 1.0 / (1.0 - P), 0.0)
        assert out_train.shape == (S, B, D)
        assert jnp.allclose(out_train, ref_train, atol=1e-6, rtol=1e-6)

    key = jax.random.PRNGKey(0)
    k1, k2 = jax.random.split(key)
    # Small shapes consistent with the module: seq=8, batch=2, d_model=32.
    run_checks(S=8, B=2, key=k1)
    # Larger S to exercise the multi-step, double-buffered grid path.
    run_checks(S=64, B=2, key=k2)

    print("KERNEL_OK")
</pallas_src>

<mosaic_0001>
module attributes {stable_mosaic.version = 11 : i64} {
  func.func @_pe_add_kernel(%arg0: i32, %arg1: memref<8x64xf32, #tpu.memory_space<vmem>>, %arg2: memref<8x32xf32, #tpu.memory_space<vmem>>, %arg3: memref<8x64xf32, #tpu.memory_space<vmem>>) attributes {dimension_semantics = [#tpu.dimension_semantics<parallel>], iteration_bounds = array<i64: 1>, scalar_prefetch = 0 : i64, scratch_operands = 0 : i64, tpu.core_type = #tpu.core_type<tc>, window_params = [{transform_indices = @transform_0, window_bounds = array<i64: 8, 64>}, {transform_indices = @transform_1, window_bounds = array<i64: 8, 32>}, {transform_indices = @transform_2, window_bounds = array<i64: 8, 64>}]} {
    %c0 = arith.constant 0 : index
    %c0_0 = arith.constant 0 : index
    %0 = vector.load %arg1[%c0, %c0_0] : memref<8x64xf32, #tpu.memory_space<vmem>>, vector<8x64xf32>
    %c0_1 = arith.constant 0 : index
    %c0_2 = arith.constant 0 : index
    %1 = vector.load %arg2[%c0_1, %c0_2] : memref<8x32xf32, #tpu.memory_space<vmem>>, vector<8x32xf32>
    %2 = tpu.concatenate %1, %1 in 1 : vector<8x32xf32>, vector<8x32xf32> -> vector<8x64xf32>
    %3 = arith.addf %0, %2 : vector<8x64xf32>
    %c0_3 = arith.constant 0 : index
    %c0_4 = arith.constant 0 : index
    %4 = vector.load %arg3[%c0_3, %c0_4] : memref<8x64xf32, #tpu.memory_space<vmem>>, vector<8x64xf32>
    tpu.vector_store %arg3[%c0_3, %c0_4], %3 {strides = array<i32>} : memref<8x64xf32, #tpu.memory_space<vmem>>, vector<8x64xf32>,
    return
  }
  func.func @transform_0(%arg0: i32) -> (i32, i32) {
    %c0_i32 = arith.constant 0 : i32
    %c0_i32_0 = arith.constant 0 : i32
    return %arg0, %c0_i32 : i32, i32
  }
  func.func @transform_1(%arg0: i32) -> (i32, i32) {
    %c0_i32 = arith.constant 0 : i32
    %c0_i32_0 = arith.constant 0 : i32
    return %arg0, %c0_i32 : i32, i32
  }
  func.func @transform_2(%arg0: i32) -> (i32, i32) {
    %c0_i32 = arith.constant 0 : i32
    %c0_i32_0 = arith.constant 0 : i32
    return %arg0, %c0_i32 : i32, i32
  }
}

</mosaic_0001>

<llo_original>
// kernel: tpu_custom_call.1
$region0: #{tpu_custom_call.1}
  #allocation0 [shape = 'u32[]', space=smem, size = 0x4, offset = 0x4, fixed_abs, tag = 'smem constant byte address 0x4 - core index']
  #allocation1 [shape = 'u32[72,128]{1,0:T(1,128)}', space=vmem, size = 0x9000, scoped, tag = 'internal scratch']
  %s0 = inlined_call_operand.hbm [shape: f32[8,64], index: 0, kind: input, shape index: {}]
  %s1 = inlined_call_operand.hbm [shape: f32[8,32], index: 1, kind: input, shape index: {}]
  %s2 = inlined_call_operand.hbm [shape: f32[8,64], index: 2, kind: output, shape index: {}]
  %s3 = sld [smem:[#allocation0]]
  $region26: #{tpu_custom_call.1} parent=0
    _
  %s5 = ssub.s32 1, %s3
  %s6 = scalar_select 0, %s5, %s3
  $region1: #{tpu_custom_call.1} parent=0
    #allocation2 [shape = 'u8[4096]{0}', space=vmem, size = 0x1000, scoped, tag = 'input window, operand 0, single buffered']
    #allocation3 [shape = 's32[1]{0}', space=sflag, size = 0x4, scoped, tag = 'scoped memory for tpu_custom_call.1']
    #allocation4 [shape = 's32[1]{0}', space=sflag, size = 0x4, scoped, tag = 'scoped memory for tpu_custom_call.1']
    #allocation5 [shape = 'u8[4096]{0}', space=vmem, size = 0x1000, scoped, tag = 'input window, operand 1, single buffered']
    #allocation6 [shape = 's32[1]{0}', space=sflag, size = 0x4, scoped, tag = 'scoped memory for tpu_custom_call.1']
    #allocation7 [shape = 'u8[4096]{0}', space=vmem, size = 0x1000, scoped, tag = 'output window, operand 0, single buffered']
    %7 = vsyncpa [#allocation3], 0
    %8 = vsyncpa [#allocation6], 0
    %9 = vsyncpa [#allocation4], 0
    // Predicated region
    $region2: #{tpu_custom_call.1} parent=1 // pred_check
      _
    $region3: #{tpu_custom_call.1} parent=1 // pred_check_branch
      %11 = sbr.rel (0) target = $region5
    $region4: #{tpu_custom_call.1} parent=1 // pred_region
      %13 = vsyncadd [#allocation3], 0
      %s15 = sshll.u32 %s0, 4
      %s16 = int_to_ptr.hbm [resolvable:$true] %s15
      %s17 = sshll.u32 [#allocation2], 4
      %s18 = int_to_ptr.vmem [resolvable:$true] %s17
      %20 = dma.hbm_to_vmem [thread:$0]  %s16, 128, %s18, [#allocation3]
    $region5: #{tpu_custom_call.1} parent=1 // pred_fallthru
      _
    // Predicated region
    $region6: #{tpu_custom_call.1} parent=1 // pred_check
      _
    $region7: #{tpu_custom_call.1} parent=1 // pred_check_branch
      %22 = sbr.rel (0) target = $region9
    $region8: #{tpu_custom_call.1} parent=1 // pred_region
      %24 = vsyncadd [#allocation6], 0
      %s26 = sshll.u32 %s1, 4
      %s27 = int_to_ptr.hbm [resolvable:$true] %s26
      %s28 = sshll.u32 [#allocation5], 4
      %s29 = int_to_ptr.vmem [resolvable:$true] %s28
      %31 = dma.hbm_to_vmem [thread:$0]  %s27, 128, %s29, [#allocation6]
    $region9: #{tpu_custom_call.1} parent=1 // pred_fallthru
      _
    // Predicated region
    $region10: #{tpu_custom_call.1} parent=1 // pred_check
      _
    $region11: #{tpu_custom_call.1} parent=1 // pred_check_branch
      %33 = sbr.rel (0) target = $region13
    $region12: #{tpu_custom_call.1} parent=1 // pred_region
      %35 = dma.done [#allocation3], 128
    $region13: #{tpu_custom_call.1} parent=1 // pred_fallthru
      _
    // Predicated region
    $region14: #{tpu_custom_call.1} parent=1 // pred_check
      _
    $region15: #{tpu_custom_call.1} parent=1 // pred_check_branch
      %37 = sbr.rel (0) target = $region17
    $region16: #{tpu_custom_call.1} parent=1 // pred_region
      %39 = dma.done [#allocation6], 128
    $region17: #{tpu_custom_call.1} parent=1 // pred_fallthru
      _
    %v40 = vld [vmem:[#allocation2] sm:$0xff]
    %v41 = vld [vmem:[#allocation5] sm:$0xff]
    %43 = vrot.lane.b32.xlu0 %v41, 32
    %v44 = vpop.permute.xlu0 %43
    %vm46 = vcmask 261120
    %v47 = vsel %vm46, %v41, %v44
    %v48 = vadd.f32 %v40, %v47
    %vm49 = vcmask 523264
    %50 = vst.msk [vmem:[#allocation7] sm:$0xff] %vm49, %v48
    // Predicated region
    $region18: #{tpu_custom_call.1} parent=1 // pred_check
      _
    $region19: #{tpu_custom_call.1} parent=1 // pred_check_branch
      %52 = sbr.rel (0) target = $region21
    $region20: #{tpu_custom_call.1} parent=1 // pred_region
      %54 = vsyncadd [#allocation4], 0
      %s56 = sshll.u32 [#allocation7], 4
      %s57 = int_to_ptr.vmem [resolvable:$true] %s56
      %s58 = sshll.u32 %s2, 4
      %s59 = int_to_ptr.hbm [resolvable:$true] %s58
      %61 = dma.vmem_to_hbm [thread:$0]  %s57, 128, %s59, [#allocation4]
    $region21: #{tpu_custom_call.1} parent=1 // pred_fallthru
      _
    // Predicated region
    $region22: #{tpu_custom_call.1} parent=1 // pred_check
      _
    $region23: #{tpu_custom_call.1} parent=1 // pred_check_branch
      %63 = sbr.rel (0) target = $region25
    $region24: #{tpu_custom_call.1} parent=1 // pred_region
      %65 = dma.done [#allocation4], 128
    $region25: #{tpu_custom_call.1} parent=1 // pred_fallthru
      _
    %66 = vsyncpa [#allocation3], 1
    %67 = vsyncpa [#allocation6], 1
    %68 = vsyncpa [#allocation4], 1

</llo_original>
